<compile_context>
chip_gen: v5e
topology: v5e:2x2
jax: 0.10.0
libtpu: 0.0.40
codegen_flags: <defaults>
</compile_context>

<pallas_src>
import functools

import jax
import jax.numpy as jnp
import numpy as np
from jax.experimental import pallas as pl
from jax.experimental.pallas import tpu as pltpu

_LANE = 128
_SUBLANE = 8


def _round_up(x, m):
    return ((x + m - 1) // m) * m


def _batch_blocking(n):
    """Padded batch size and block size: >=2 blocks when possible, <=128 rows."""
    np_ = _round_up(max(n, 1), _SUBLANE)
    if np_ <= _SUBLANE:
        return np_, np_
    bn = min(128, _round_up((np_ + 1) // 2, _SUBLANE))
    np_ = _round_up(np_, bn)
    return np_, bn


def _vocab_tile(op):
    for tv in (512, 384, 256, 128):
        if op % tv == 0:
            return tv
    return op  # op is always a multiple of 128, never reached


@functools.cache
def _vmem_limit_bytes():
    phys = 64 * 1024 * 1024
    try:
        info = pltpu.get_tpu_info()
        cap = getattr(info, "vmem_capacity_bytes", None)
        if cap:
            phys = int(cap)
    except Exception:
        pass
    # ~96 MiB on v5e/v6e (128 MiB physical), ~48 MiB on v7x (64 MiB physical).
    return int(min(phys * 3 // 4, 96 * 1024 * 1024))


# ----------------------------- Pallas kernels --------------------------------
def _make_step_kernel(o_actual, n_actual, block_n, tile_v):
    """Main decoder-step kernel, specialized on static sizes."""

    def kernel(emb_ref, hid_ref, enc_ref, enorm_ref,
               wc_ctx_ref, wc_emb_ref, bc_ref,
               wih_ref, whh_ref, bh_ref,
               wl_ref, bl_ref,
               logits_ref, lse_ref, hid_out_ref,
               m_sc, l_sc):
        i = pl.program_id(0)          # batch block
        j = pl.program_id(1)          # vocab tile

        # ---- attention + attn_combine + RNN cell: once per batch block ------
        @pl.when(j == 0)
        def _():
            emb = emb_ref[...]                                   # (BN, Ep)
            hid = hid_ref[...]                                   # (BN, Hp)
            enc = enc_ref[...].astype(jnp.float32)               # (BN, T, Hp)

            # cosine-similarity attention on VPU/XLU (M=1 matmuls waste the MXU)
            dot = jnp.sum(hid[:, None, :] * enc, axis=-1)        # (BN, T)
            nh = jnp.sqrt(jnp.sum(hid * hid, axis=-1, keepdims=True))
            denom = nh * enorm_ref[...] + 1e-8                   # enc norms hoisted
            sim = dot * pl.reciprocal(denom, approx=True)        # EUP
            sim = sim - jnp.max(sim, axis=-1, keepdims=True)
            p = jnp.exp(sim)
            attn = p * pl.reciprocal(jnp.sum(p, axis=-1, keepdims=True),
                                     approx=True)                # (BN, T)
            ctx = jnp.sum(attn[:, :, None] * enc, axis=1)        # (BN, Hp)

            # attn_combine: Linear on concat([ctx, emb]) with pre-split weight
            emb2 = (jnp.dot(ctx, wc_ctx_ref[...], preferred_element_type=jnp.float32)
                    + jnp.dot(emb, wc_emb_ref[...], preferred_element_type=jnp.float32)
                    + bc_ref[...])                               # (BN, Ep)

            # vanilla RNN (tanh) cell, seq_len == 1; b_ih + b_hh pre-summed
            h_new = jnp.tanh(
                jnp.dot(emb2, wih_ref[...], preferred_element_type=jnp.float32)
                + jnp.dot(hid, whh_ref[...], preferred_element_type=jnp.float32)
                + bh_ref[...])                                   # (BN, Hp)

            # keep padded batch rows zero so the aliased hidden buffer can be
            # fed straight back into the next decode step
            row = i * block_n + jax.lax.broadcasted_iota(jnp.int32, h_new.shape, 0)
            h_new = jnp.where(row < n_actual, h_new, 0.0)
            hid_out_ref[...] = h_new                             # lane-dense store

            m_sc[...] = jnp.full_like(m_sc, -jnp.inf)
            l_sc[...] = jnp.zeros_like(l_sc)

        # ---- vocab-tiled output projection + online log-sum-exp -------------
        h = hid_out_ref[...]                                     # persists across j
        logits = (jnp.dot(h.astype(wl_ref.dtype), wl_ref[...],
                          preferred_element_type=jnp.float32)
                  + bl_ref[...])                                 # (BN, TV)
        col = j * tile_v + jax.lax.broadcasted_iota(jnp.int32, logits.shape, 1)
        logits = jnp.where(col < o_actual, logits, jnp.float32(-1e30))
        logits_ref[...] = logits                                 # lane-dense store

        m_prev = m_sc[...]
        m_new = jnp.maximum(m_prev, jnp.max(logits, axis=-1, keepdims=True))
        l_sc[...] = (l_sc[...] * jnp.exp(m_prev - m_new)
                     + jnp.sum(jnp.exp(logits - m_new), axis=-1, keepdims=True))
        m_sc[...] = m_new

        @pl.when(j == pl.num_programs(1) - 1)
        def _():
            lse_ref[...] = m_sc[...] + jnp.log(l_sc[...])

    return kernel


def _finalize_kernel(logits_ref, lse_ref, out_ref):
    # second pass of the tiled log-softmax: log_probs = logits - lse
    out_ref[...] = logits_ref[...] - lse_ref[...]


# ------------------------- padded param / state prep -------------------------
def _pad2(a, rows, cols):
    return jnp.pad(a, ((0, rows - a.shape[0]), (0, cols - a.shape[1])))


def prepare_params(params, *, stream_bf16=False):
    """Pad / pre-arrange weights once (hoisted out of the decode loop)."""
    V, E = params["embedding"].shape
    He = params["wc_ctx"].shape[0]
    H = params["w_hh"].shape[0]
    O = params["w_l"].shape[1]
    assert He == H, "cosine attention requires encoder_hidden == decoder_hidden"
    Ep, Hp, Op = _round_up(E, _LANE), _round_up(H, _LANE), _round_up(O, _LANE)

    f32 = jnp.float32
    w_l = _pad2(params["w_l"].astype(f32), Hp, Op)
    prepped = {
        "embedding": _pad2(params["embedding"].astype(f32), V, Ep),
        "wc_ctx": _pad2(params["wc_ctx"].astype(f32), Hp, Ep),
        "wc_emb": _pad2(params["wc_emb"].astype(f32), Ep, Ep),
        "bc": _pad2(params["bc"].astype(f32), 1, Ep),
        "w_ih": _pad2(params["w_ih"].astype(f32), Ep, Hp),
        "w_hh": _pad2(params["w_hh"].astype(f32), Hp, Hp),
        "b_h": _pad2((params["b_ih"] + params["b_hh"]).astype(f32), 1, Hp),
        "w_l": w_l.astype(jnp.bfloat16) if stream_bf16 else w_l,
        "b_l": _pad2(params["b_l"].astype(f32), 1, Op),
    }
    meta = {"E": E, "H": H, "He": He, "O": O, "Ep": Ep, "Hp": Hp, "Op": Op}
    return prepped, meta


def prepare_state(hidden, encoder_outputs, meta, *, stream_bf16=False):
    """Pad carried state / encoder tensors once (hoisted out of the decode loop)."""
    N = hidden.shape[1]
    Np, _ = _batch_blocking(N)
    Hp = meta["Hp"]
    hid_p = jnp.pad(hidden[0].astype(jnp.float32),
                    ((0, Np - N), (0, Hp - meta["H"])))
    enc32 = encoder_outputs.astype(jnp.float32)
    enc_norm = jnp.sqrt(jnp.sum(enc32 * enc32, axis=-1))          # (N, T), hoisted
    enc_norm_p = jnp.pad(enc_norm, ((0, Np - N), (0, 0)))
    enc_p = jnp.pad(enc32, ((0, Np - N), (0, 0), (0, Hp - meta["He"])))
    if stream_bf16:
        enc_p = enc_p.astype(jnp.bfloat16)
    return hid_p, enc_p, enc_norm_p


# ------------------------------ jitted step ----------------------------------
@functools.partial(jax.jit, static_argnames=("o_actual", "n_actual"))
def _decoder_step_impl(tok_p, hid_p, enc_p, enc_norm_p, prepped, *,
                       o_actual, n_actual):
    Np, Hp = hid_p.shape
    T = enc_p.shape[1]
    Ep = prepped["wc_emb"].shape[0]
    Op = prepped["w_l"].shape[1]
    Np2, BN = _batch_blocking(n_actual)
    assert Np2 == Np
    TV = _vocab_tile(Op)
    nb, nv = Np // BN, Op // TV
    limit = _vmem_limit_bytes()

    # embedding gather (glue); dropout is identity in eval mode
    emb_p = jnp.take(prepped["embedding"], tok_p, axis=0)         # (Np, Ep)

    b2 = lambda i, j: (i, 0)
    b3 = lambda i, j: (i, 0, 0)
    const = lambda i, j: (0, 0)
    vtile = lambda i, j: (0, j)
    single = pl.Buffered(buffer_count=1)   # constant-index weights: no double buffer

    logits_p, lse_p, hid_new_p = pl.pallas_call(
        _make_step_kernel(o_actual, n_actual, BN, TV),
        out_shape=(jax.ShapeDtypeStruct((Np, Op), jnp.float32),   # masked raw logits
                   jax.ShapeDtypeStruct((Np, 1), jnp.float32),    # log-sum-exp
                   jax.ShapeDtypeStruct((Np, Hp), jnp.float32)),  # new hidden
        grid=(nb, nv),
        in_specs=[
            pl.BlockSpec((BN, Ep), b2),                           # embedded tokens
            pl.BlockSpec((BN, Hp), b2),                           # previous hidden
            pl.BlockSpec((BN, T, Hp), b3),                        # encoder outputs
            pl.BlockSpec((BN, T), b2),                            # encoder norms (hoisted)
            pl.BlockSpec((Hp, Ep), const, pipeline_mode=single),  # attn_combine (ctx half)
            pl.BlockSpec((Ep, Ep), const, pipeline_mode=single),  # attn_combine (emb half)
            pl.BlockSpec((1, Ep), const, pipeline_mode=single),   # attn_combine bias
            pl.BlockSpec((Ep, Hp), const, pipeline_mode=single),  # RNN W_ih
            pl.BlockSpec((Hp, Hp), const, pipeline_mode=single),  # RNN W_hh
            pl.BlockSpec((1, Hp), const, pipeline_mode=single),   # RNN bias (pre-summed)
            pl.BlockSpec((Hp, TV), vtile),                        # W_out, vocab-streamed
            pl.BlockSpec((1, TV), vtile),                         # b_out, vocab-streamed
        ],
        out_specs=(pl.BlockSpec((BN, TV), lambda i, j: (i, j)),
                   pl.BlockSpec((BN, 1), b2),
                   pl.BlockSpec((BN, Hp), b2)),
        scratch_shapes=[pltpu.VMEM((BN, 1), jnp.float32),         # running max
                        pltpu.VMEM((BN, 1), jnp.float32)],        # running sum-exp
        input_output_aliases={1: 2},                              # hidden updated in place
        compiler_params=pltpu.CompilerParams(
            dimension_semantics=("parallel", "arbitrary"),
            vmem_limit_bytes=limit),
    )(emb_p, hid_p, enc_p, enc_norm_p,
      prepped["wc_ctx"], prepped["wc_emb"], prepped["bc"],
      prepped["w_ih"], prepped["w_hh"], prepped["b_h"],
      prepped["w_l"], prepped["b_l"])

    # second, memory-bound pass of the tiled log-softmax (lane-dense store)
    logprobs_p = pl.pallas_call(
        _finalize_kernel,
        out_shape=jax.ShapeDtypeStruct((Np, Op), jnp.float32),
        grid=(nb, nv),
        in_specs=[pl.BlockSpec((BN, TV), lambda i, j: (i, j)),
                  pl.BlockSpec((BN, 1), b2)],
        out_specs=pl.BlockSpec((BN, TV), lambda i, j: (i, j)),
        input_output_aliases={0: 0},                              # reuse logits buffer
        compiler_params=pltpu.CompilerParams(
            dimension_semantics=("parallel", "parallel"),
            vmem_limit_bytes=limit),
    )(logits_p, lse_p)

    return logprobs_p, hid_new_p


def decoder_forward(tokens, hidden, encoder_outputs, params, *, stream_bf16=False):
    """Single decode step matching Decoder.forward (eval mode, attention=True).

    In a real autoregressive loop, call prepare_params / prepare_state once and
    keep the padded hidden state between _decoder_step_impl calls; the slicing
    below happens only when handing results back to the caller.
    """
    if tokens.ndim == 1:
        tokens = tokens[:, None]
    prepped, meta = prepare_params(params, stream_bf16=stream_bf16)
    N = tokens.shape[0]
    hid_p, enc_p, enc_norm_p = prepare_state(hidden, encoder_outputs, meta,
                                             stream_bf16=stream_bf16)
    Np = hid_p.shape[0]
    tok_p = jnp.pad(tokens[:, 0].astype(jnp.int32), (0, Np - N))
    logprobs_p, hid_new_p = _decoder_step_impl(
        tok_p, hid_p, enc_p, enc_norm_p, prepped,
        o_actual=meta["O"], n_actual=N)
    out = logprobs_p[:N, :meta["O"]]
    hid_new = hid_new_p[:N, :meta["H"]][None]
    return out, hid_new


# --------------------------- pure-JAX reference ------------------------------
def decoder_reference(tokens, hidden, encoder_outputs, params):
    emb = jnp.take(params["embedding"], tokens[:, 0], axis=0)
    hid = hidden[0]
    enc = encoder_outputs
    dot = jnp.einsum("nh,nth->nt", hid, enc)
    norm_h = jnp.linalg.norm(hid, axis=1, keepdims=True)
    norm_e = jnp.linalg.norm(enc, axis=2)
    attn = jax.nn.softmax(dot / (norm_h * norm_e + 1e-8), axis=1)
    ctx = jnp.einsum("nt,nth->nh", attn, enc)
    emb2 = ctx @ params["wc_ctx"] + emb @ params["wc_emb"] + params["bc"]
    h_new = jnp.tanh(emb2 @ params["w_ih"] + params["b_ih"]
                     + hid @ params["w_hh"] + params["b_hh"])
    logits = h_new @ params["w_l"] + params["b_l"]
    return jax.nn.log_softmax(logits, axis=-1), h_new[None]


# ---------------------------------- main --------------------------------------
if __name__ == "__main__":
    N, T = 2, 8            # batch, encoder seq len
    E = 32                 # emb_size
    He = 32                # encoder_hidden_size
    H = 32                 # decoder_hidden_size
    O = 48                 # output_size (vocab)

    key = jax.random.PRNGKey(0)
    ks = jax.random.split(key, 12)

    params = {
        "embedding": jax.random.normal(ks[0], (O, E), jnp.float32) * 0.1,
        # attn_combine: Linear(He + E, E), weight split into context / embedding halves
        "wc_ctx": jax.random.normal(ks[1], (He, E), jnp.float32) * 0.1,
        "wc_emb": jax.random.normal(ks[2], (E, E), jnp.float32) * 0.1,
        "bc":     jax.random.normal(ks[3], (1, E), jnp.float32) * 0.1,
        # nn.RNN (tanh) cell weights, stored (in, out)
        "w_ih":   jax.random.normal(ks[4], (E, H), jnp.float32) * 0.1,
        "b_ih":   jax.random.normal(ks[5], (1, H), jnp.float32) * 0.1,
        "w_hh":   jax.random.normal(ks[6], (H, H), jnp.float32) * 0.1,
        "b_hh":   jax.random.normal(ks[7], (1, H), jnp.float32) * 0.1,
        # linear1: Linear(H, O)
        "w_l":    jax.random.normal(ks[8], (H, O), jnp.float32) * 0.1,
        "b_l":    jax.random.normal(ks[9], (1, O), jnp.float32) * 0.1,
    }

    tokens = jax.random.randint(ks[10], (N, 1), 0, O, dtype=jnp.int32)
    hidden = jax.random.normal(ks[11], (1, N, H), jnp.float32)
    encoder_outputs = jax.random.normal(jax.random.PRNGKey(1), (N, T, He), jnp.float32)

    out_ref, h_ref = decoder_reference(tokens, hidden, encoder_outputs, params)

    # f32 streaming path (tolerance loosened from 2e-5 only because the softmax /
    # cosine denominators now use the approximate EUP reciprocal path)
    out, h_new = decoder_forward(tokens, hidden, encoder_outputs, params)
    out = jax.block_until_ready(out)
    h_new = jax.block_until_ready(h_new)
    np.testing.assert_allclose(np.asarray(out), np.asarray(out_ref),
                               rtol=2e-3, atol=2e-3)
    np.testing.assert_allclose(np.asarray(h_new), np.asarray(h_ref),
                               rtol=2e-3, atol=2e-3)
    assert out.shape == (N, O) and h_new.shape == (1, N, H)

    # bf16 streaming of the two big operands (enc, W_out) with f32 accumulation
    out_b, h_new_b = decoder_forward(tokens, hidden, encoder_outputs, params,
                                     stream_bf16=True)
    out_b = jax.block_until_ready(out_b)
    h_new_b = jax.block_until_ready(h_new_b)
    np.testing.assert_allclose(np.asarray(out_b), np.asarray(out_ref),
                               rtol=5e-2, atol=5e-2)
    np.testing.assert_allclose(np.asarray(h_new_b), np.asarray(h_ref),
                               rtol=5e-2, atol=5e-2)

    print("KERNEL_OK")
</pallas_src>

<mosaic_0001>
module attributes {stable_mosaic.version = 11 : i64} {
  func.func @_finalize_kernel(%arg0: i32, %arg1: i32, %arg2: memref<8x128xf32, #tpu.memory_space<vmem>>, %arg3: memref<8x1xf32, #tpu.memory_space<vmem>>, %arg4: memref<8x128xf32, #tpu.memory_space<vmem>>) attributes {dimension_semantics = [#tpu.dimension_semantics<parallel>, #tpu.dimension_semantics<parallel>], iteration_bounds = array<i64: 1, 1>, scalar_prefetch = 0 : i64, scratch_operands = 0 : i64, tpu.core_type = #tpu.core_type<tc>, window_params = [{transform_indices = @transform_0, window_bounds = array<i64: 8, 128>}, {transform_indices = @transform_1, window_bounds = array<i64: 8, 1>}, {transform_indices = @transform_2, window_bounds = array<i64: 8, 128>}]} {
    %c0 = arith.constant 0 : index
    %c0_0 = arith.constant 0 : index
    %0 = vector.load %arg2[%c0, %c0_0] : memref<8x128xf32, #tpu.memory_space<vmem>>, vector<8x128xf32>
    %c0_1 = arith.constant 0 : index
    %c0_2 = arith.constant 0 : index
    %1 = vector.load %arg3[%c0_1, %c0_2] : memref<8x1xf32, #tpu.memory_space<vmem>>, vector<8x1xf32>
    %2 = vector.broadcast %1 : vector<8x1xf32> to vector<8x128xf32>
    %3 = arith.subf %0, %2 : vector<8x128xf32>
    %c0_3 = arith.constant 0 : index
    %c0_4 = arith.constant 0 : index
    %4 = vector.load %arg4[%c0_3, %c0_4] : memref<8x128xf32, #tpu.memory_space<vmem>>, vector<8x128xf32>
    tpu.vector_store %arg4[%c0_3, %c0_4], %3 {strides = array<i32>} : memref<8x128xf32, #tpu.memory_space<vmem>>, vector<8x128xf32>,
    return
  }
  func.func @transform_0(%arg0: i32, %arg1: i32) -> (i32, i32) {
    %c0_i32 = arith.constant 0 : i32
    return %arg0, %arg1 : i32, i32
  }
  func.func @transform_1(%arg0: i32, %arg1: i32) -> (i32, i32) {
    %c0_i32 = arith.constant 0 : i32
    %c0_i32_0 = arith.constant 0 : i32
    return %arg0, %c0_i32 : i32, i32
  }
  func.func @transform_2(%arg0: i32, %arg1: i32) -> (i32, i32) {
    %c0_i32 = arith.constant 0 : i32
    return %arg0, %arg1 : i32, i32
  }
}

module attributes {stable_mosaic.version = 11 : i64} {
  func.func @kernel(%arg0: i32, %arg1: i32, %arg2: memref<8x128xf32, #tpu.memory_space<vmem>>, %arg3: memref<8x128xf32, #tpu.memory_space<vmem>>, %arg4: memref<8x8x128xf32, #tpu.memory_space<vmem>>, %arg5: memref<8x8xf32, #tpu.memory_space<vmem>>, %arg6: memref<128x128xf32, #tpu.memory_space<vmem>>, %arg7: memref<128x128xf32, #tpu.memory_space<vmem>>, %arg8: memref<1x128xf32, #tpu.memory_space<vmem>>, %arg9: memref<128x128xf32, #tpu.memory_space<vmem>>, %arg10: memref<128x128xf32, #tpu.memory_space<vmem>>, %arg11: memref<1x128xf32, #tpu.memory_space<vmem>>, %arg12: memref<128x128xf32, #tpu.memory_space<vmem>>, %arg13: memref<1x128xf32, #tpu.memory_space<vmem>>, %arg14: memref<8x128xf32, #tpu.memory_space<vmem>>, %arg15: memref<8x1xf32, #tpu.memory_space<vmem>>, %arg16: memref<8x128xf32, #tpu.memory_space<vmem>>, %arg17: memref<8x1xf32, #tpu.memory_space<vmem>>, %arg18: memref<8x1xf32, #tpu.memory_space<vmem>>) attributes {dimension_semantics = [#tpu.dimension_semantics<parallel>, #tpu.dimension_semantics<arbitrary>], iteration_bounds = array<i64: 1, 1>, scalar_prefetch = 0 : i64, scratch_operands = 2 : i64, tpu.core_type = #tpu.core_type<tc>, window_params = [{transform_indices = @transform_0, window_bounds = array<i64: 8, 128>}, {transform_indices = @transform_1, window_bounds = array<i64: 8, 128>}, {transform_indices = @transform_2, window_bounds = array<i64: 8, 8, 128>}, {transform_indices = @transform_3, window_bounds = array<i64: 8, 8>}, {pipeline_mode = #tpu.pipeline_mode<synchronous>, transform_indices = @transform_4, window_bounds = array<i64: 128, 128>}, {pipeline_mode = #tpu.pipeline_mode<synchronous>, transform_indices = @transform_5, window_bounds = array<i64: 128, 128>}, {pipeline_mode = #tpu.pipeline_mode<synchronous>, transform_indices = @transform_6, window_bounds = array<i64: 1, 128>}, {pipeline_mode = #tpu.pipeline_mode<synchronous>, transform_indices = @transform_7, window_bounds = array<i64: 128, 128>}, {pipeline_mode = #tpu.pipeline_mode<synchronous>, transform_indices = @transform_8, window_bounds = array<i64: 128, 128>}, {pipeline_mode = #tpu.pipeline_mode<synchronous>, transform_indices = @transform_9, window_bounds = array<i64: 1, 128>}, {transform_indices = @transform_10, window_bounds = array<i64: 128, 128>}, {transform_indices = @transform_11, window_bounds = array<i64: 1, 128>}, {transform_indices = @transform_12, window_bounds = array<i64: 8, 128>}, {transform_indices = @transform_13, window_bounds = array<i64: 8, 1>}, {transform_indices = @transform_14, window_bounds = array<i64: 8, 128>}]} {
    %c0_i32 = arith.constant 0 : i32
    %0 = arith.cmpi eq, %arg1, %c0_i32 : i32
    %1 = arith.extui %0 : i1 to i32
    %c0_i32_0 = arith.constant 0 : i32
    %2 = arith.cmpi ne, %1, %c0_i32_0 : i32
    scf.if %2 {
      %c0_21 = arith.constant 0 : index
      %c0_22 = arith.constant 0 : index
      %37 = vector.load %arg2[%c0_21, %c0_22] : memref<8x128xf32, #tpu.memory_space<vmem>>, vector<8x128xf32>
      %c0_23 = arith.constant 0 : index
      %c0_24 = arith.constant 0 : index
      %38 = vector.load %arg3[%c0_23, %c0_24] : memref<8x128xf32, #tpu.memory_space<vmem>>, vector<8x128xf32>
      %c0_25 = arith.constant 0 : index
      %c0_26 = arith.constant 0 : index
      %c0_27 = arith.constant 0 : index
      %39 = vector.load %arg4[%c0_25, %c0_26, %c0_27] : memref<8x8x128xf32, #tpu.memory_space<vmem>>, vector<8x8x128xf32>
      %40 = vector.shape_cast %38 : vector<8x128xf32> to vector<8x1x128xf32>
      %41 = vector.broadcast %40 : vector<8x1x128xf32> to vector<8x8x128xf32>
      %42 = arith.mulf %41, %39 : vector<8x8x128xf32>
      %cst_28 = arith.constant dense<0.000000e+00> : vector<8x8xf32>
      %43 = vector.multi_reduction <add>, %42, %cst_28 [2] : vector<8x8x128xf32> to vector<8x8xf32>
      %44 = arith.mulf %38, %38 : vector<8x128xf32>
      %cst_29 = arith.constant dense<0.000000e+00> : vector<8xf32>
      %45 = vector.multi_reduction <add>, %44, %cst_29 [1] : vector<8x128xf32> to vector<8xf32>
      %46 = vector.shape_cast %45 : vector<8xf32> to vector<8x1xf32>
      %47 = math.sqrt %46 : vector<8x1xf32>
      %c0_30 = arith.constant 0 : index
      %c0_31 = arith.constant 0 : index
      %48 = vector.load %arg5[%c0_30, %c0_31] : memref<8x8xf32, #tpu.memory_space<vmem>>, vector<8x8xf32>
      %49 = vector.broadcast %47 : vector<8x1xf32> to vector<8x8xf32>
      %50 = arith.mulf %49, %48 : vector<8x8xf32>
      %cst_32 = arith.constant 9.99999993E-9 : f32
      %51 = vector.broadcast %cst_32 : f32 to vector<8x8xf32>
      %52 = arith.addf %50, %51 : vector<8x8xf32>
      %53 = tpu.reciprocal %52 {approx = true} : vector<8x8xf32> -> vector<8x8xf32>
      %54 = arith.mulf %43, %53 : vector<8x8xf32>
      %cst_33 = arith.constant dense<0xFF800000> : vector<8xf32>
      %55 = vector.multi_reduction <maximumf>, %54, %cst_33 [1] : vector<8x8xf32> to vector<8xf32>
      %56 = vector.shape_cast %55 : vector<8xf32> to vector<8x1xf32>
      %57 = vector.broadcast %56 : vector<8x1xf32> to vector<8x8xf32>
      %58 = arith.subf %54, %57 : vector<8x8xf32>
      %59 = math.exp %58 : vector<8x8xf32>
      %cst_34 = arith.constant dense<0.000000e+00> : vector<8xf32>
      %60 = vector.multi_reduction <add>, %59, %cst_34 [1] : vector<8x8xf32> to vector<8xf32>
      %61 = vector.shape_cast %60 : vector<8xf32> to vector<8x1xf32>
      %62 = tpu.reciprocal %61 {approx = true} : vector<8x1xf32> -> vector<8x1xf32>
      %63 = vector.broadcast %62 : vector<8x1xf32> to vector<8x8xf32>
      %64 = arith.mulf %59, %63 : vector<8x8xf32>
      %65 = vector.shape_cast %64 : vector<8x8xf32> to vector<8x8x1xf32>
      %66 = vector.broadcast %65 : vector<8x8x1xf32> to vector<8x8x128xf32>
      %67 = arith.mulf %66, %39 : vector<8x8x128xf32>
      %cst_35 = arith.constant dense<0.000000e+00> : vector<8x128xf32>
      %68 = vector.multi_reduction <add>, %67, %cst_35 [1] : vector<8x8x128xf32> to vector<8x128xf32>
      %c0_36 = arith.constant 0 : index
      %c0_37 = arith.constant 0 : index
      %69 = vector.load %arg6[%c0_36, %c0_37] : memref<128x128xf32, #tpu.memory_space<vmem>>, vector<128x128xf32>
      %cst_38 = arith.constant dense<0.000000e+00> : vector<8x128xf32>
      %70 = tpu.matmul %68, %69, %cst_38 {dimension_numbers = #tpu.dot_dimension_numbers<[1], [0], [0], [1], [0, 0, 1, 1], [], []>} : vector<8x128xf32>, vector<128x128xf32>, vector<8x128xf32> -> vector<8x128xf32>
      %c0_39 = arith.constant 0 : index
      %c0_40 = arith.constant 0 : index
      %71 = vector.load %arg7[%c0_39, %c0_40] : memref<128x128xf32, #tpu.memory_space<vmem>>, vector<128x128xf32>
      %cst_41 = arith.constant dense<0.000000e+00> : vector<8x128xf32>
      %72 = tpu.matmul %37, %71, %cst_41 {dimension_numbers = #tpu.dot_dimension_numbers<[1], [0], [0], [1], [0, 0, 1, 1], [], []>} : vector<8x128xf32>, vector<128x128xf32>, vector<8x128xf32> -> vector<8x128xf32>
      %73 = arith.addf %70, %72 : vector<8x128xf32>
      %c0_42 = arith.constant 0 : index
      %c0_43 = arith.constant 0 : index
      %74 = vector.load %arg8[%c0_42, %c0_43] : memref<1x128xf32, #tpu.memory_space<vmem>>, vector<1x128xf32>
      %75 = vector.broadcast %74 : vector<1x128xf32> to vector<8x128xf32>
      %76 = arith.addf %73, %75 : vector<8x128xf32>
      %c0_44 = arith.constant 0 : index
      %c0_45 = arith.constant 0 : index
      %77 = vector.load %arg9[%c0_44, %c0_45] : memref<128x128xf32, #tpu.memory_space<vmem>>, vector<128x128xf32>
      %cst_46 = arith.constant dense<0.000000e+00> : vector<8x128xf32>
      %78 = tpu.matmul %76, %77, %cst_46 {dimension_numbers = #tpu.dot_dimension_numbers<[1], [0], [0], [1], [0, 0, 1, 1], [], []>} : vector<8x128xf32>, vector<128x128xf32>, vector<8x128xf32> -> vector<8x128xf32>
      %c0_47 = arith.constant 0 : index
      %c0_48 = arith.constant 0 : index
      %79 = vector.load %arg10[%c0_47, %c0_48] : memref<128x128xf32, #tpu.memory_space<vmem>>, vector<128x128xf32>
      %cst_49 = arith.constant dense<0.000000e+00> : vector<8x128xf32>
      %80 = tpu.matmul %38, %79, %cst_49 {dimension_numbers = #tpu.dot_dimension_numbers<[1], [0], [0], [1], [0, 0, 1, 1], [], []>} : vector<8x128xf32>, vector<128x128xf32>, vector<8x128xf32> -> vector<8x128xf32>
      %81 = arith.addf %78, %80 : vector<8x128xf32>
      %c0_50 = arith.constant 0 : index
      %c0_51 = arith.constant 0 : index
      %82 = vector.load %arg11[%c0_50, %c0_51] : memref<1x128xf32, #tpu.memory_space<vmem>>, vector<1x128xf32>
      %83 = vector.broadcast %82 : vector<1x128xf32> to vector<8x128xf32>
      %84 = arith.addf %81, %83 : vector<8x128xf32>
      %85 = math.tanh %84 : vector<8x128xf32>
      %c8_i32 = arith.constant 8 : i32
      %86 = arith.muli %arg0, %c8_i32 : i32
      %87 = tpu.iota {dimensions = array<i32: 0>} : vector<8x128xi32>
      %88 = vector.broadcast %86 : i32 to vector<8x128xi32>
      %89 = arith.addi %88, %87 : vector<8x128xi32>
      %c2_i32 = arith.constant 2 : i32
      %90 = vector.broadcast %c2_i32 : i32 to vector<8x128xi32>
      %91 = arith.cmpi slt, %89, %90 : vector<8x128xi32>
      %cst_52 = arith.constant 0.000000e+00 : f32
      %92 = vector.broadcast %cst_52 : f32 to vector<8x128xf32>
      %93 = arith.select %91, %85, %92 : vector<8x128xi1>, vector<8x128xf32>
      %c0_53 = arith.constant 0 : index
      %c0_54 = arith.constant 0 : index
      %94 = vector.load %arg16[%c0_53, %c0_54] : memref<8x128xf32, #tpu.memory_space<vmem>>, vector<8x128xf32>
      tpu.vector_store %arg16[%c0_53, %c0_54], %93 {strides = array<i32>} : memref<8x128xf32, #tpu.memory_space<vmem>>, vector<8x128xf32>,
      %cst_55 = arith.constant 0xFF800000 : f32
      %95 = vector.broadcast %cst_55 : f32 to vector<8x1xf32>
      %c0_56 = arith.constant 0 : index
      %c0_57 = arith.constant 0 : index
      %96 = vector.load %arg17[%c0_56, %c0_57] : memref<8x1xf32, #tpu.memory_space<vmem>>, vector<8x1xf32>
      tpu.vector_store %arg17[%c0_56, %c0_57], %95 {strides = array<i32>} : memref<8x1xf32, #tpu.memory_space<vmem>>, vector<8x1xf32>,
      %cst_58 = arith.constant 0.000000e+00 : f32
      %97 = vector.broadcast %cst_58 : f32 to vector<8x1xf32>
      %c0_59 = arith.constant 0 : index
      %c0_60 = arith.constant 0 : index
      %98 = vector.load %arg18[%c0_59, %c0_60] : memref<8x1xf32, #tpu.memory_space<vmem>>, vector<8x1xf32>
      tpu.vector_store %arg18[%c0_59, %c0_60], %97 {strides = array<i32>} : memref<8x1xf32, #tpu.memory_space<vmem>>, vector<8x1xf32>,
    } else {
    }
    %c0 = arith.constant 0 : index
    %c0_1 = arith.constant 0 : index
    %3 = vector.load %arg16[%c0, %c0_1] : memref<8x128xf32, #tpu.memory_space<vmem>>, vector<8x128xf32>
    %c0_2 = arith.constant 0 : index
    %c0_3 = arith.constant 0 : index
    %4 = vector.load %arg12[%c0_2, %c0_3] : memref<128x128xf32, #tpu.memory_space<vmem>>, vector<128x128xf32>
    %cst = arith.constant dense<0.000000e+00> : vector<8x128xf32>
    %5 = tpu.matmul %3, %4, %cst {dimension_numbers = #tpu.dot_dimension_numbers<[1], [0], [0], [1], [0, 0, 1, 1], [], []>} : vector<8x128xf32>, vector<128x128xf32>, vector<8x128xf32> -> vector<8x128xf32>
    %c0_4 = arith.constant 0 : index
    %c0_5 = arith.constant 0 : index
    %6 = vector.load %arg13[%c0_4, %c0_5] : memref<1x128xf32, #tpu.memory_space<vmem>>, vector<1x128xf32>
    %7 = vector.broadcast %6 : vector<1x128xf32> to vector<8x128xf32>
    %8 = arith.addf %5, %7 : vector<8x128xf32>
    %c128_i32 = arith.constant 128 : i32
    %9 = arith.muli %arg1, %c128_i32 : i32
    %10 = tpu.iota {dimensions = array<i32: 1>} : vector<8x128xi32>
    %11 = vector.broadcast %9 : i32 to vector<8x128xi32>
    %12 = arith.addi %11, %10 : vector<8x128xi32>
    %c48_i32 = arith.constant 48 : i32
    %13 = vector.broadcast %c48_i32 : i32 to vector<8x128xi32>
    %14 = arith.cmpi slt, %12, %13 : vector<8x128xi32>
    %cst_6 = arith.constant -1.000000e+30 : f32
    %15 = vector.broadcast %cst_6 : f32 to vector<8x128xf32>
    %16 = arith.select %14, %8, %15 : vector<8x128xi1>, vector<8x128xf32>
    %c0_7 = arith.constant 0 : index
    %c0_8 = arith.constant 0 : index
    %17 = vector.load %arg14[%c0_7, %c0_8] : memref<8x128xf32, #tpu.memory_space<vmem>>, vector<8x128xf32>
    tpu.vector_store %arg14[%c0_7, %c0_8], %16 {strides = array<i32>} : memref<8x128xf32, #tpu.memory_space<vmem>>, vector<8x128xf32>,
    %c0_9 = arith.constant 0 : index
    %c0_10 = arith.constant 0 : index
    %18 = vector.load %arg17[%c0_9, %c0_10] : memref<8x1xf32, #tpu.memory_space<vmem>>, vector<8x1xf32>
    %cst_11 = arith.constant dense<0xFF800000> : vector<8xf32>
    %19 = vector.multi_reduction <maximumf>, %16, %cst_11 [1] : vector<8x128xf32> to vector<8xf32>
    %20 = vector.shape_cast %19 : vector<8xf32> to vector<8x1xf32>
    %21 = arith.maximumf %18, %20 : vector<8x1xf32>
    %c0_12 = arith.constant 0 : index
    %c0_13 = arith.constant 0 : index
    %22 = vector.load %arg18[%c0_12, %c0_13] : memref<8x1xf32, #tpu.memory_space<vmem>>, vector<8x1xf32>
    %23 = arith.subf %18, %21 : vector<8x1xf32>
    %24 = math.exp %23 : vector<8x1xf32>
    %25 = arith.mulf %22, %24 : vector<8x1xf32>
    %26 = vector.broadcast %21 : vector<8x1xf32> to vector<8x128xf32>
    %27 = arith.subf %16, %26 : vector<8x128xf32>
    %28 = math.exp %27 : vector<8x128xf32>
    %cst_14 = arith.constant dense<0.000000e+00> : vector<8xf32>
    %29 = vector.multi_reduction <add>, %28, %cst_14 [1] : vector<8x128xf32> to vector<8xf32>
    %30 = vector.shape_cast %29 : vector<8xf32> to vector<8x1xf32>
    %31 = arith.addf %25, %30 : vector<8x1xf32>
    %c0_15 = arith.constant 0 : index
    %c0_16 = arith.constant 0 : index
    %32 = vector.load %arg18[%c0_15, %c0_16] : memref<8x1xf32, #tpu.memory_space<vmem>>, vector<8x1xf32>
    tpu.vector_store %arg18[%c0_15, %c0_16], %31 {strides = array<i32>} : memref<8x1xf32, #tpu.memory_space<vmem>>, vector<8x1xf32>,
    %c0_17 = arith.constant 0 : index
    %c0_18 = arith.constant 0 : index
    %33 = vector.load %arg17[%c0_17, %c0_18] : memref<8x1xf32, #tpu.memory_space<vmem>>, vector<8x1xf32>
    tpu.vector_store %arg17[%c0_17, %c0_18], %21 {strides = array<i32>} : memref<8x1xf32, #tpu.memory_space<vmem>>, vector<8x1xf32>,
    %c0_i32_19 = arith.constant 0 : i32
    %34 = arith.cmpi eq, %arg1, %c0_i32_19 : i32
    %35 = arith.extui %34 : i1 to i32
    %c0_i32_20 = arith.constant 0 : i32
    %36 = arith.cmpi ne, %35, %c0_i32_20 : i32
    scf.if %36 {
      %c0_21 = arith.constant 0 : index
      %c0_22 = arith.constant 0 : index
      %37 = vector.load %arg17[%c0_21, %c0_22] : memref<8x1xf32, #tpu.memory_space<vmem>>, vector<8x1xf32>
      %c0_23 = arith.constant 0 : index
      %c0_24 = arith.constant 0 : index
      %38 = vector.load %arg18[%c0_23, %c0_24] : memref<8x1xf32, #tpu.memory_space<vmem>>, vector<8x1xf32>
      %39 = math.log %38 : vector<8x1xf32>
      %40 = arith.addf %37, %39 : vector<8x1xf32>
      %c0_25 = arith.constant 0 : index
      %c0_26 = arith.constant 0 : index
      %41 = vector.load %arg15[%c0_25, %c0_26] : memref<8x1xf32, #tpu.memory_space<vmem>>, vector<8x1xf32>
      tpu.vector_store %arg15[%c0_25, %c0_26], %40 {strides = array<i32>} : memref<8x1xf32, #tpu.memory_space<vmem>>, vector<8x1xf32>,
    } else {
    }
    return
  }
  func.func @transform_0(%arg0: i32, %arg1: i32) -> (i32, i32) {
    %c0_i32 = arith.constant 0 : i32
    %c0_i32_0 = arith.constant 0 : i32
    return %arg0, %c0_i32 : i32, i32
  }
  func.func @transform_1(%arg0: i32, %arg1: i32) -> (i32, i32) {
    %c0_i32 = arith.constant 0 : i32
    %c0_i32_0 = arith.constant 0 : i32
    return %arg0, %c0_i32 : i32, i32
  }
  func.func @transform_2(%arg0: i32, %arg1: i32) -> (i32, i32, i32) {
    %c0_i32 = arith.constant 0 : i32
    %c0_i32_0 = arith.constant 0 : i32
    %c0_i32_1 = arith.constant 0 : i32
    return %arg0, %c0_i32, %c0_i32_0 : i32, i32, i32
  }
  func.func @transform_3(%arg0: i32, %arg1: i32) -> (i32, i32) {
    %c0_i32 = arith.constant 0 : i32
    %c0_i32_0 = arith.constant 0 : i32
    return %arg0, %c0_i32 : i32, i32
  }
  func.func @transform_4(%arg0: i32, %arg1: i32) -> (i32, i32) {
    %c0_i32 = arith.constant 0 : i32
    %c0_i32_0 = arith.constant 0 : i32
    %c0_i32_1 = arith.constant 0 : i32
    return %c0_i32, %c0_i32_0 : i32, i32
  }
  func.func @transform_5(%arg0: i32, %arg1: i32) -> (i32, i32) {
    %c0_i32 = arith.constant 0 : i32
    %c0_i32_0 = arith.constant 0 : i32
    %c0_i32_1 = arith.constant 0 : i32
    return %c0_i32, %c0_i32_0 : i32, i32
  }
  func.func @transform_6(%arg0: i32, %arg1: i32) -> (i32, i32) {
    %c0_i32 = arith.constant 0 : i32
    %c0_i32_0 = arith.constant 0 : i32
    %c0_i32_1 = arith.constant 0 : i32
    return %c0_i32, %c0_i32_0 : i32, i32
  }
  func.func @transform_7(%arg0: i32, %arg1: i32) -> (i32, i32) {
    %c0_i32 = arith.constant 0 : i32
    %c0_i32_0 = arith.constant 0 : i32
    %c0_i32_1 = arith.constant 0 : i32
    return %c0_i32, %c0_i32_0 : i32, i32
  }
  func.func @transform_8(%arg0: i32, %arg1: i32) -> (i32, i32) {
    %c0_i32 = arith.constant 0 : i32
    %c0_i32_0 = arith.constant 0 : i32
    %c0_i32_1 = arith.constant 0 : i32
    return %c0_i32, %c0_i32_0 : i32, i32
  }
  func.func @transform_9(%arg0: i32, %arg1: i32) -> (i32, i32) {
    %c0_i32 = arith.constant 0 : i32
    %c0_i32_0 = arith.constant 0 : i32
    %c0_i32_1 = arith.constant 0 : i32
    return %c0_i32, %c0_i32_0 : i32, i32
  }
  func.func @transform_10(%arg0: i32, %arg1: i32) -> (i32, i32) {
    %c0_i32 = arith.constant 0 : i32
    %c0_i32_0 = arith.constant 0 : i32
    return %c0_i32, %arg1 : i32, i32
  }
  func.func @transform_11(%arg0: i32, %arg1: i32) -> (i32, i32) {
    %c0_i32 = arith.constant 0 : i32
    %c0_i32_0 = arith.constant 0 : i32
    return %c0_i32, %arg1 : i32, i32
  }
  func.func @transform_12(%arg0: i32, %arg1: i32) -> (i32, i32) {
    %c0_i32 = arith.constant 0 : i32
    return %arg0, %arg1 : i32, i32
  }
  func.func @transform_13(%arg0: i32, %arg1: i32) -> (i32, i32) {
    %c0_i32 = arith.constant 0 : i32
    %c0_i32_0 = arith.constant 0 : i32
    return %arg0, %c0_i32 : i32, i32
  }
  func.func @transform_14(%arg0: i32, %arg1: i32) -> (i32, i32) {
    %c0_i32 = arith.constant 0 : i32
    %c0_i32_0 = arith.constant 0 : i32
    return %arg0, %c0_i32 : i32, i32
  }
}

</mosaic_0001>

<llo_original>
// kernel: _decoder_step_impl.3
$region0: #{_decoder_step_impl.3}
  #allocation0 [shape = 'u32[]', space=smem, size = 0x4, offset = 0x4, fixed_abs, tag = 'smem constant byte address 0x4 - core index']
  #allocation1 [shape = 'u32[72,128]{1,0:T(1,128)}', space=vmem, size = 0x9000, scoped, tag = 'internal scratch']
  %s0 = inlined_call_operand.vmem [shape: f32[8,128], index: 0, kind: input, shape index: {}, may-alias: {0,2}]
  %s1 = inlined_call_operand.vmem [shape: f32[8,1], index: 1, kind: input, shape index: {}]
  %s2 = inlined_call_operand.vmem [shape: f32[8,128], index: 2, kind: output, shape index: {}, may-alias: {0,2}]
  %s3 = sld [smem:[#allocation0]]
  $region18: #{_decoder_step_impl.3} parent=0
    _
  %s5 = ssub.s32 1, %s3
  %s6 = scalar_select 0, %s5, %s3
  // Predicated region
  $region2: #{_decoder_step_impl.3} parent=0 // pred_check
    _
  $region3: #{_decoder_step_impl.3} parent=0 // pred_check_branch
    %8 = sbr.rel (0) target = $region5
  $region4: #{_decoder_step_impl.3} parent=0 // pred_region
    _
  $region5: #{_decoder_step_impl.3} parent=0 // pred_fallthru
    _
  // Predicated region
  $region6: #{_decoder_step_impl.3} parent=0 // pred_check
    _
  $region7: #{_decoder_step_impl.3} parent=0 // pred_check_branch
    %10 = sbr.rel (0) target = $region9
  $region8: #{_decoder_step_impl.3} parent=0 // pred_region
    _
  $region9: #{_decoder_step_impl.3} parent=0 // pred_fallthru
    _
  %v11 = vld [vmem:[%s0] sm:$0xff]
  %v12 = vld [vmem:[%s1] sm:$0xff]
  %14 = vset.pattern.permute.xlu0 0
  %15 = vperm.xlu0 %14, %v12
  %v16 = vpop.permute.xlu0 %15
  %v18 = vsub.f32 %v11, %v16
  %19 = vst [vmem:[%s2] sm:$0xff] %v18
  // Predicated region
  $region10: #{_decoder_step_impl.3} parent=0 // pred_check
    _
  $region11: #{_decoder_step_impl.3} parent=0 // pred_check_branch
    %21 = sbr.rel (0) target = $region13
  $region12: #{_decoder_step_impl.3} parent=0 // pred_region
    _
  $region13: #{_decoder_step_impl.3} parent=0 // pred_fallthru
    _
  // Predicated region
  $region14: #{_decoder_step_impl.3} parent=0 // pred_check
    _
  $region15: #{_decoder_step_impl.3} parent=0 // pred_check_branch
    %23 = sbr.rel (0) target = $region17
  $region16: #{_decoder_step_impl.3} parent=0 // pred_region
    _
  $region17: #{_decoder_step_impl.3} parent=0 // pred_fallthru
    _

// kernel: _decoder_step_impl.2
$region0: #{_decoder_step_impl.2}
  #allocation0 [shape = 'u32[]', space=smem, size = 0x4, offset = 0x4, fixed_abs, tag = 'smem constant byte address 0x4 - core index']
  #allocation1 [shape = 'u32[72,128]{1,0:T(1,128)}', space=vmem, size = 0x9000, scoped, tag = 'internal scratch']
  #allocation2 [shape = 'f32[8,1]{1,0:T(8,128)}', space=vmem, size = 0x1000, scoped, tag = 'scratch operand']
  #allocation3 [shape = 'f32[8,1]{1,0:T(8,128)}', space=vmem, size = 0x1000, scoped, tag = 'scratch operand']
  %s0 = inlined_call_operand.vmem [shape: f32[8,128], index: 0, kind: input, shape index: {}]
  %s1 = inlined_call_operand.vmem [shape: f32[8,128], index: 1, kind: input, shape index: {}, may-alias: {1,14}]
  %s2 = inlined_call_operand.vmem [shape: f32[8,8,128], index: 2, kind: input, shape index: {}]
  %s3 = inlined_call_operand.vmem [shape: f32[8,8], index: 3, kind: input, shape index: {}]
  %s4 = inlined_call_operand.hbm [shape: f32[128,128], index: 4, kind: input, shape index: {}]
  %s5 = inlined_call_operand.hbm [shape: f32[128,128], index: 5, kind: input, shape index: {}]
  %s6 = inlined_call_operand.vmem [shape: f32[1,128], index: 6, kind: input, shape index: {}]
  %s7 = inlined_call_operand.hbm [shape: f32[128,128], index: 7, kind: input, shape index: {}]
  %s8 = inlined_call_operand.hbm [shape: f32[128,128], index: 8, kind: input, shape index: {}]
  %s9 = inlined_call_operand.vmem [shape: f32[1,128], index: 9, kind: input, shape index: {}]
  %s10 = inlined_call_operand.hbm [shape: f32[128,128], index: 10, kind: input, shape index: {}]
  %s11 = inlined_call_operand.vmem [shape: f32[1,128], index: 11, kind: input, shape index: {}]
  %s12 = inlined_call_operand.vmem [shape: f32[8,128], index: 12, kind: output, shape index: {0}]
  %s13 = inlined_call_operand.vmem [shape: f32[8,1], index: 13, kind: output, shape index: {1}]
  %s14 = inlined_call_operand.vmem [shape: f32[8,128], index: 14, kind: output, shape index: {2}, may-alias: {1,14}]
  %15 = xla_tuple %s12, %s13, %s14
  %s16 = sld [smem:[#allocation0]]
  $region102: #{_decoder_step_impl.2} parent=0
    _
  %s18 = ssub.s32 1, %s16
  %s19 = scalar_select 0, %s18, %s16
  $region1: #{_decoder_step_impl.2} parent=0
    #allocation4 [shape = 'u8[65536]{0}', space=vmem, size = 0x10000, scoped, tag = 'input window, operand 4, single buffered']
    #allocation5 [shape = 's32[1]{0}', space=sflag, size = 0x4, scoped, tag = 'scoped memory for _decoder_step_impl.2']
    #allocation6 [shape = 'u8[65536]{0}', space=vmem, size = 0x10000, scoped, tag = 'input window, operand 5, single buffered']
    #allocation7 [shape = 's32[1]{0}', space=sflag, size = 0x4, scoped, tag = 'scoped memory for _decoder_step_impl.2']
    #allocation8 [shape = 'u8[65536]{0}', space=vmem, size = 0x10000, scoped, tag = 'input window, operand 7, single buffered']
    #allocation9 [shape = 'u8[65536]{0}', space=vmem, size = 0x10000, scoped, tag = 'input window, operand 8, single buffered']
    #allocation10 [shape = 's32[1]{0}', space=sflag, size = 0x4, scoped, tag = 'scoped memory for _decoder_step_impl.2']
    #allocation11 [shape = 'u8[65536]{0}', space=vmem, size = 0x10000, scoped, tag = 'input window, operand 10, single buffered']
    %20 = vsyncpa [#allocation5], 0
    %21 = vsyncpa [#allocation7], 0
    %22 = vsyncpa [#allocation10], 0
    // Predicated region
    $region2: #{_decoder_step_impl.2} parent=1 // pred_check
      _
    $region3: #{_decoder_step_impl.2} parent=1 // pred_check_branch
      %24 = sbr.rel (0) target = $region5
    $region4: #{_decoder_step_impl.2} parent=1 // pred_region
      _
    $region5: #{_decoder_step_impl.2} parent=1 // pred_fallthru
      _
    // Predicated region
    $region6: #{_decoder_step_impl.2} parent=1 // pred_check
      _
    $region7: #{_decoder_step_impl.2} parent=1 // pred_check_branch
      %26 = sbr.rel (0) target = $region9
    $region8: #{_decoder_step_impl.2} parent=1 // pred_region
      _
    $region9: #{_decoder_step_impl.2} parent=1 // pred_fallthru
      _
    // Predicated region
    $region10: #{_decoder_step_impl.2} parent=1 // pred_check
      _
    $region11: #{_decoder_step_impl.2} parent=1 // pred_check_branch
      %28 = sbr.rel (0) target = $region13
    $region12: #{_decoder_step_impl.2} parent=1 // pred_region
      _
    $region13: #{_decoder_step_impl.2} parent=1 // pred_fallthru
      _
    // Predicated region
    $region14: #{_decoder_step_impl.2} parent=1 // pred_check
      _
    $region15: #{_decoder_step_impl.2} parent=1 // pred_check_branch
      %30 = sbr.rel (0) target = $region17
    $region16: #{_decoder_step_impl.2} parent=1 // pred_region
      _
    $region17: #{_decoder_step_impl.2} parent=1 // pred_fallthru
      _
    // Predicated region
    $region18: #{_decoder_step_impl.2} parent=1 // pred_check
      _
    $region19: #{_decoder_step_impl.2} parent=1 // pred_check_branch
      %32 = sbr.rel (0) target = $region21
    $region20: #{_decoder_step_impl.2} parent=1 // pred_region
      %34 = vsyncadd [#allocation5], 0
      %s35 = sshll.u32 %s4, 4
      %s36 = int_to_ptr.hbm [resolvable:$true] %s35
      %s37 = sshll.u32 [#allocation4], 4
      %s38 = int_to_ptr.vmem [resolvable:$true] %s37
      %43 = dma.hbm_to_vmem [thread:$0]  %s36, 2048, %s38, [#allocation5], 128, 128, 8
    $region21: #{_decoder_step_impl.2} parent=1 // pred_fallthru
      _
    // Predicated region
    $region22: #{_decoder_step_impl.2} parent=1 // pred_check
      _
    $region23: #{_decoder_step_impl.2} parent=1 // pred_check_branch
      %45 = sbr.rel (0) target = $region25
    $region24: #{_decoder_step_impl.2} parent=1 // pred_region
      %47 = vsyncadd [#allocation7], 0
      %s48 = sshll.u32 %s5, 4
      %s49 = int_to_ptr.hbm [resolvable:$true] %s48
      %s50 = sshll.u32 [#allocation6], 4
      %s51 = int_to_ptr.vmem [resolvable:$true] %s50
      %56 = dma.hbm_to_vmem [thread:$0]  %s49, 2048, %s51, [#allocation7], 128, 128, 8
    $region25: #{_decoder_step_impl.2} parent=1 // pred_fallthru
      _
    // Predicated region
    $region26: #{_decoder_step_impl.2} parent=1 // pred_check
      _
    $region27: #{_decoder_step_impl.2} parent=1 // pred_check_branch
      %58 = sbr.rel (0) target = $region29
    $region28: #{_decoder_step_impl.2} parent=1 // pred_region
      _
    $region29: #{_decoder_step_impl.2} parent=1 // pred_fallthru
      _
    // Predicated region
    $region30: #{_decoder_step_impl.2} parent=1 // pred_check
      _
    $region31: #{_decoder_step_impl.2} parent=1 // pred_check_branch
      %60 = sbr.rel (0) target = $region33
    $region32: #{_decoder_step_impl.2} parent=1 // pred_region
      %62 = vsyncadd [#allocation7], 0
      %s63 = sshll.u32 %s7, 4
      %s64 = int_to_ptr.hbm [resolvable:$true] %s63
      %s65 = sshll.u32 [#allocation8], 4
      %s66 = int_to_ptr.vmem [resolvable:$true] %s65
      %71 = dma.hbm_to_vmem [thread:$0]  %s64, 2048, %s66, [#allocation7], 128, 128, 8
    $region33: #{_decoder_step_impl.2} parent=1 // pred_fallthru
      _
    // Predicated region
    $region34: #{_decoder_step_impl.2} parent=1 // pred_check
      _
    $region35: #{_decoder_step_impl.2} parent=1 // pred_check_branch
      %73 = sbr.rel (0) target = $region37
    $region36: #{_decoder_step_impl.2} parent=1 // pred_region
      %75 = vsyncadd [#allocation10], 0
      %s76 = sshll.u32 %s8, 4
      %s77 = int_to_ptr.hbm [resolvable:$true] %s76
      %s78 = sshll.u32 [#allocation9], 4
      %s79 = int_to_ptr.vmem [resolvable:$true] %s78
      %84 = dma.hbm_to_vmem [thread:$0]  %s77, 2048, %s79, [#allocation10], 128, 128, 8
    $region37: #{_decoder_step_impl.2} parent=1 // pred_fallthru
      _
    // Predicated region
    $region38: #{_decoder_step_impl.2} parent=1 // pred_check
      _
    $region39: #{_decoder_step_impl.2} parent=1 // pred_check_branch
      %86 = sbr.rel (0) target = $region41
    $region40: #{_decoder_step_impl.2} parent=1 // pred_region
      _
    $region41: #{_decoder_step_impl.2} parent=1 // pred_fallthru
      _
    // Predicated region
    $region42: #{_decoder_step_impl.2} parent=1 // pred_check
      _
    $region43: #{_decoder_step_impl.2} parent=1 // pred_check_branch
      %88 = sbr.rel (0) target = $region45
    $region44: #{_decoder_step_impl.2} parent=1 // pred_region
      %90 = vsyncadd [#allocation10], 0
      %s91 = sshll.u32 %s10, 4
      %s92 = int_to_ptr.hbm [resolvable:$true] %s91
      %s93 = sshll.u32 [#allocation11], 4
      %s94 = int_to_ptr.vmem [resolvable:$true] %s93
      %99 = dma.hbm_to_vmem [thread:$0]  %s92, 2048, %s94, [#allocation10], 128, 128, 8
    $region45: #{_decoder_step_impl.2} parent=1 // pred_fallthru
      _
    // Predicated region
    $region46: #{_decoder_step_impl.2} parent=1 // pred_check
      _
    $region47: #{_decoder_step_impl.2} parent=1 // pred_check_branch
      %101 = sbr.rel (0) target = $region49
    $region48: #{_decoder_step_impl.2} parent=1 // pred_region
      _
    $region49: #{_decoder_step_impl.2} parent=1 // pred_fallthru
      _
    // Predicated region
    $region50: #{_decoder_step_impl.2} parent=1 // pred_check
      _
    $region51: #{_decoder_step_impl.2} parent=1 // pred_check_branch
      %103 = sbr.rel (0) target = $region53
    $region52: #{_decoder_step_impl.2} parent=1 // pred_region
      %105 = dma.done [#allocation5], 2048
    $region53: #{_decoder_step_impl.2} parent=1 // pred_fallthru
      _
    // Predicated region
    $region54: #{_decoder_step_impl.2} parent=1 // pred_check
      _
    $region55: #{_decoder_step_impl.2} parent=1 // pred_check_branch
      %107 = sbr.rel (0) target = $region57
    $region56: #{_decoder_step_impl.2} parent=1 // pred_region
      %109 = dma.done [#allocation7], 2048
    $region57: #{_decoder_step_impl.2} parent=1 // pred_fallthru
      _
    // Predicated region
    $region58: #{_decoder_step_impl.2} parent=1 // pred_check
      _
    $region59: #{_decoder_step_impl.2} parent=1 // pred_check_branch
      %111 = sbr.rel (0) target = $region61
    $region60: #{_decoder_step_impl.2} parent=1 // pred_region
      %113 = dma.done [#allocation7], 2048
    $region61: #{_decoder_step_impl.2} parent=1 // pred_fallthru
      _
    // Predicated region
    $region62: #{_decoder_step_impl.2} parent=1 // pred_check
      _
    $region63: #{_decoder_step_impl.2} parent=1 // pred_check_branch
      %115 = sbr.rel (0) target = $region65
    $region64: #{_decoder_step_impl.2} parent=1 // pred_region
      %117 = dma.done [#allocation10], 2048
    $region65: #{_decoder_step_impl.2} parent=1 // pred_fallthru
      _
    // Predicated region
    $region66: #{_decoder_step_impl.2} parent=1 // pred_check
      _
    $region67: #{_decoder_step_impl.2} parent=1 // pred_check_branch
      %119 = sbr.rel (0) target = $region69
    $region68: #{_decoder_step_impl.2} parent=1 // pred_region
      %121 = dma.done [#allocation10], 2048
    $region69: #{_decoder_step_impl.2} parent=1 // pred_fallthru
      _
    %p122 = scmp.eq.s32.totalorder 0, 0
    // Predicated region
    $region70: #{_decoder_step_impl.2} parent=1 // pred_check
      %p123 = pneg %p122
    $region71: #{_decoder_step_impl.2} parent=1 // pred_check_branch
      %125 = sbr.rel (%p123) target = $region73
    $region72: #{_decoder_step_impl.2} parent=1 // pred_region
      %v126 = vld [vmem:[%s0] sm:$0xff]
      %v127 = vld [vmem:[%s1] sm:$0xff]
      %v128 = vld [vmem:[%s2] sm:$0xff]
      %v129 = vld [vmem:[%s2 + $0x8] sm:$0xff]
      %v130 = vld [vmem:[%s2 + $0x10] sm:$0xff]
      %v131 = vld [vmem:[%s2 + $0x18] sm:$0xff]
      %v132 = vld [vmem:[%s2 + $0x20] sm:$0xff]
      %v133 = vld [vmem:[%s2 + $0x28] sm:$0xff]
      %v134 = vld [vmem:[%s2 + $0x30] sm:$0xff]
      %v135 = vld [vmem:[%s2 + $0x38] sm:$0xff]
      %v137 = vrot.slane %v127, 1
      %v138 = vrot.slane %v127, 2
      %v139 = vrot.slane %v127, 3
      %v140 = vrot.slane %v127, 4
      %v141 = vrot.slane %v127, 5
      %v142 = vrot.slane %v127, 6
      %v143 = vrot.slane %v127, 7
      %v144 = vperm.slane %v127, 0
      %v145 = vperm.slane %v137, 0
      %v146 = vperm.slane %v138, 0
      %v147 = vperm.slane %v139, 0
      %v148 = vperm.slane %v140, 0
      %v149 = vperm.slane %v141, 0
      %v150 = vperm.slane %v142, 0
      %v151 = vperm.slane %v143, 0
      %v160 = vmul.f32 %v144, %v128
      %v161 = vmul.f32 %v145, %v129
      %v162 = vmul.f32 %v146, %v130
      %v163 = vmul.f32 %v147, %v131
      %v164 = vmul.f32 %v148, %v132
      %v165 = vmul.f32 %v149, %v133
      %v166 = vmul.f32 %v150, %v134
      %v167 = vmul.f32 %v151, %v135
      %168 = vadd.xlane.f32.xlu0 %v160
      %v169 = vpop.xlane.xlu0 %168
      %170 = vadd.xlane.f32.xlu0 %v161
      %v171 = vpop.xlane.xlu0 %170
      %172 = vadd.xlane.f32.xlu0 %v162
      %v173 = vpop.xlane.xlu0 %172
      %174 = vadd.xlane.f32.xlu0 %v163
      %v175 = vpop.xlane.xlu0 %174
      %176 = vadd.xlane.f32.xlu0 %v164
      %v177 = vpop.xlane.xlu0 %176
      %178 = vadd.xlane.f32.xlu0 %v165
      %v179 = vpop.xlane.xlu0 %178
      %180 = vadd.xlane.f32.xlu0 %v166
      %v181 = vpop.xlane.xlu0 %180
      %182 = vadd.xlane.f32.xlu0 %v167
      %v183 = vpop.xlane.xlu0 %182
      %v184 = vmul.f32 %v127, %v127
      %185 = vadd.xlane.f32.xlu0 %v184
      %v186 = vpop.xlane.xlu0 %185
      %v187 = vrsqrt.pop %v186
      %v188 = vmul.f32 %v187, %v186
      %v189 = vmul.f32 %v188, %v187
      %v190 = vmul.f32 0.5, %v189
      %v191 = vsub.f32 1.5, %v190
      %v192 = vmul.f32 %v187, %v191
      %v193 = vmul.f32 %v186, %v192
      %vm194 = vcmp.eq.f32.partialorder %v186, inf
      %v195 = vsel %vm194, %v186, %v193
      %vm196 = vcmp.eq.f32.partialorder %v186, 0.0
      %v197 = vand.u32 %v186, 2147483648
      %v198 = vsel %vm196, %v197, %v195
      %v199 = vld [vmem:[%s3] sm:$0xff]
      %v200 = vmul.f32 %v198, %v199
      %v201 = vadd.f32 %v200, 1e-08
      %v202 = vrcp.pop %v201
      %v204 = vperm.slane %v202, 0
      %v205 = vlaneseq
      %v206 = vshrl.u32 %v205, 7
      %208 = vset.pattern.permute.xlu0 %v206
      %209 = vperm.xlu0 %208, %v204
      %v210 = vpop.permute.xlu0 %209
      %v211 = vperm.slane %v202, 1
      %v212 = vlaneseq
      %v213 = vshrl.u32 %v212, 7
      %215 = vset.pattern.permute.xlu0 %v213
      %216 = vperm.xlu0 %215, %v211
      %v217 = vpop.permute.xlu0 %216
      %v218 = vperm.slane %v202, 2
      %v219 = vlaneseq
      %v220 = vshrl.u32 %v219, 7
      %222 = vset.pattern.permute.xlu0 %v220
      %223 = vperm.xlu0 %222, %v218
      %v224 = vpop.permute.xlu0 %223
      %v225 = vperm.slane %v202, 3
      %v226 = vlaneseq
      %v227 = vshrl.u32 %v226, 7
      %229 = vset.pattern.permute.xlu0 %v227
      %230 = vperm.xlu0 %229, %v225
      %v231 = vpop.permute.xlu0 %230
      %v232 = vperm.slane %v202, 4
      %v233 = vlaneseq
      %v234 = vshrl.u32 %v233, 7
      %236 = vset.pattern.permute.xlu0 %v234
      %237 = vperm.xlu0 %236, %v232
      %v238 = vpop.permute.xlu0 %237
      %v239 = vperm.slane %v202, 5
      %v240 = vlaneseq
      %v241 = vshrl.u32 %v240, 7
      %243 = vset.pattern.permute.xlu0 %v241
      %244 = vperm.xlu0 %243, %v239
      %v245 = vpop.permute.xlu0 %244
      %v246 = vperm.slane %v202, 6
      %v247 = vlaneseq
      %v248 = vshrl.u32 %v247, 7
      %250 = vset.pattern.permute.xlu0 %v248
      %251 = vperm.xlu0 %250, %v246
      %v252 = vpop.permute.xlu0 %251
      %v253 = vperm.slane %v202, 7
      %v254 = vlaneseq
      %v255 = vshrl.u32 %v254, 7
      %257 = vset.pattern.permute.xlu0 %v255
      %258 = vperm.xlu0 %257, %v253
      %v259 = vpop.permute.xlu0 %258
      %v268 = vmul.f32 %v169, %v210
      %v269 = vmul.f32 %v171, %v217
      %v270 = vmul.f32 %v173, %v224
      %v271 = vmul.f32 %v175, %v231
      %v272 = vmul.f32 %v177, %v238
      %v273 = vmul.f32 %v179, %v245
      %v274 = vmul.f32 %v181, %v252
      %v275 = vmul.f32 %v183, %v259
      %284 = vset.pattern.permute.xlu0 0
      %285 = vperm.xlu0 %284, %v268
      %v286 = vpop.permute.xlu0 %285
      %287 = vset.pattern.permute.xlu0 0
      %288 = vperm.xlu0 %287, %v269
      %v289 = vpop.permute.xlu0 %288
      %290 = vset.pattern.permute.xlu0 0
      %291 = vperm.xlu0 %290, %v270
      %v292 = vpop.permute.xlu0 %291
      %293 = vset.pattern.permute.xlu0 0
      %294 = vperm.xlu0 %293, %v271
      %v295 = vpop.permute.xlu0 %294
      %296 = vset.pattern.permute.xlu0 0
      %297 = vperm.xlu0 %296, %v272
      %v298 = vpop.permute.xlu0 %297
      %299 = vset.pattern.permute.xlu0 0
      %300 = vperm.xlu0 %299, %v273
      %v301 = vpop.permute.xlu0 %300
      %302 = vset.pattern.permute.xlu0 0
      %303 = vperm.xlu0 %302, %v274
      %v304 = vpop.permute.xlu0 %303
      %305 = vset.pattern.permute.xlu0 0
      %306 = vperm.xlu0 %305, %v275
      %v307 = vpop.permute.xlu0 %306
      %v308 = vlaneseq
      %v309 = vand.u32 %v308, 127
      %v310 = vperm.slane %v286, %v309
      %v311 = vperm.slane %v289, %v309
      %v312 = vperm.slane %v292, %v309
      %v313 = vperm.slane %v295, %v309
      %v314 = vperm.slane %v298, %v309
      %v315 = vperm.slane %v301, %v309
      %v316 = vperm.slane %v304, %v309
      %v317 = vperm.slane %v307, %v309
      %vm318 = vcmask 1041409
      %v319 = vsel %vm318, %v311, %v310
      %vm320 = vcmask 1042434
      %v321 = vsel %vm320, %v312, %v319
      %vm322 = vcmask 1043459
      %v323 = vsel %vm322, %v313, %v321
      %vm324 = vcmask 1044484
      %v325 = vsel %vm324, %v314, %v323
      %vm326 = vcmask 1045509
      %v327 = vsel %vm326, %v315, %v325
      %vm328 = vcmask 1046534
      %v329 = vsel %vm328, %v316, %v327
      %vm330 = vcmask 1047559
      %v331 = vsel %vm330, %v317, %v329
      %vm333 = vcmask 64512
      %v334 = vsel %vm333, %v331, -inf
      %335 = vmax.xlane.f32.xlu0 %v334
      %v336 = vpop.xlane.xlu0 %335
      %v338 = vperm.slane %v336, 0
      %v339 = vperm.slane %v336, 1
      %v340 = vperm.slane %v336, 2
      %v341 = vperm.slane %v336, 3
      %v342 = vperm.slane %v336, 4
      %v343 = vperm.slane %v336, 5
      %v344 = vperm.slane %v336, 6
      %v345 = vperm.slane %v336, 7
      %v354 = vsub.f32 %v268, %v338
      %v355 = vsub.f32 %v269, %v339
      %v356 = vsub.f32 %v270, %v340
      %v357 = vsub.f32 %v271, %v341
      %v358 = vsub.f32 %v272, %v342
      %v359 = vsub.f32 %v273, %v343
      %v360 = vsub.f32 %v274, %v344
      %v361 = vsub.f32 %v275, %v345
      %v362 = vmul.f32 %v354, 1.442695
      %v363 = vpow.pop %v362
      %v364 = vmul.f32 %v355, 1.442695
      %v365 = vpow.pop %v364
      %v366 = vmul.f32 %v356, 1.442695
      %v367 = vpow.pop %v366
      %v368 = vmul.f32 %v357, 1.442695
      %v369 = vpow.pop %v368
      %v370 = vmul.f32 %v358, 1.442695
      %v371 = vpow.pop %v370
      %v372 = vmul.f32 %v359, 1.442695
      %v373 = vpow.pop %v372
      %v374 = vmul.f32 %v360, 1.442695
      %v375 = vpow.pop %v374
      %v376 = vmul.f32 %v361, 1.442695
      %v377 = vpow.pop %v376
      %386 = vset.pattern.permute.xlu0 0
      %387 = vperm.xlu0 %386, %v363
      %v388 = vpop.permute.xlu0 %387
      %389 = vset.pattern.permute.xlu0 0
      %390 = vperm.xlu0 %389, %v365
      %v391 = vpop.permute.xlu0 %390
      %392 = vset.pattern.permute.xlu0 0
      %393 = vperm.xlu0 %392, %v367
      %v394 = vpop.permute.xlu0 %393
      %395 = vset.pattern.permute.xlu0 0
      %396 = vperm.xlu0 %395, %v369
      %v397 = vpop.permute.xlu0 %396
      %398 = vset.pattern.permute.xlu0 0
      %399 = vperm.xlu0 %398, %v371
      %v400 = vpop.permute.xlu0 %399
      %401 = vset.pattern.permute.xlu0 0
      %402 = vperm.xlu0 %401, %v373
      %v403 = vpop.permute.xlu0 %402
      %404 = vset.pattern.permute.xlu0 0
      %405 = vperm.xlu0 %404, %v375
      %v406 = vpop.permute.xlu0 %405
      %407 = vset.pattern.permute.xlu0 0
      %408 = vperm.xlu0 %407, %v377
      %v409 = vpop.permute.xlu0 %408
      %v410 = vperm.slane %v388, %v309
      %v411 = vperm.slane %v391, %v309
      %v412 = vperm.slane %v394, %v309
      %v413 = vperm.slane %v397, %v309
      %v414 = vperm.slane %v400, %v309
      %v415 = vperm.slane %v403, %v309
      %v416 = vperm.slane %v406, %v309
      %v417 = vperm.slane %v409, %v309
      %v418 = vsel %vm318, %v411, %v410
      %v419 = vsel %vm320, %v412, %v418
      %v420 = vsel %vm322, %v413, %v419
      %v421 = vsel %vm324, %v414, %v420
      %v422 = vsel %vm326, %v415, %v421
      %v423 = vsel %vm328, %v416, %v422
      %v424 = vsel %vm330, %v417, %v423
      %v426 = vsel %vm333, %v424, 0.0
      %427 = vadd.xlane.f32.xlu0 %v426
      %v428 = vpop.xlane.xlu0 %427
      %v429 = vrcp.pop %v428
      %v431 = vperm.slane %v429, 0
      %v432 = vperm.slane %v429, 1
      %v433 = vperm.slane %v429, 2
      %v434 = vperm.slane %v429, 3
      %v435 = vperm.slane %v429, 4
      %v436 = vperm.slane %v429, 5
      %v437 = vperm.slane %v429, 6
      %v438 = vperm.slane %v429, 7
      %v447 = vmul.f32 %v363, %v431
      %v448 = vmul.f32 %v365, %v432
      %v449 = vmul.f32 %v367, %v433
      %v450 = vmul.f32 %v369, %v434
      %v451 = vmul.f32 %v371, %v435
      %v452 = vmul.f32 %v373, %v436
      %v453 = vmul.f32 %v375, %v437
      %v454 = vmul.f32 %v377, %v438
      %456 = vset.pattern.permute.xlu0 0
      %457 = vperm.xlu0 %456, %v447
      %v458 = vpop.permute.xlu0 %457
      %461 = vset.pattern.permute.xlu0 0
      %462 = vperm.xlu0 %461, %v448
      %v463 = vpop.permute.xlu0 %462
      %466 = vset.pattern.permute.xlu0 0
      %467 = vperm.xlu0 %466, %v449
      %v468 = vpop.permute.xlu0 %467
      %471 = vset.pattern.permute.xlu0 0
      %472 = vperm.xlu0 %471, %v450
      %v473 = vpop.permute.xlu0 %472
      %476 = vset.pattern.permute.xlu0 0
      %477 = vperm.xlu0 %476, %v451
      %v478 = vpop.permute.xlu0 %477
      %481 = vset.pattern.permute.xlu0 0
      %482 = vperm.xlu0 %481, %v452
      %v483 = vpop.permute.xlu0 %482
      %486 = vset.pattern.permute.xlu0 0
      %487 = vperm.xlu0 %486, %v453
      %v488 = vpop.permute.xlu0 %487
      %491 = vset.pattern.permute.xlu0 0
      %492 = vperm.xlu0 %491, %v454
      %v493 = vpop.permute.xlu0 %492
      %v495 = vmul.f32 %v458, %v128
      %v496 = vmul.f32 %v463, %v129
      %v497 = vmul.f32 %v468, %v130
      %v498 = vmul.f32 %v473, %v131
      %v499 = vmul.f32 %v478, %v132
      %v500 = vmul.f32 %v483, %v133
      %v501 = vmul.f32 %v488, %v134
      %v502 = vmul.f32 %v493, %v135
      %v503 = vrot.slane %v495, 4
      %v504 = vadd.f32 %v495, %v503
      %v505 = vrot.slane %v504, 2
      %v506 = vadd.f32 %v504, %v505
      %v507 = vrot.slane %v506, 1
      %v508 = vadd.f32 %v506, %v507
      %v509 = vrot.slane %v496, 4
      %v510 = vadd.f32 %v496, %v509
      %v511 = vrot.slane %v510, 2
      %v512 = vadd.f32 %v510, %v511
      %v513 = vrot.slane %v512, 1
      %v514 = vadd.f32 %v512, %v513
      %v515 = vrot.slane %v497, 4
      %v516 = vadd.f32 %v497, %v515
      %v517 = vrot.slane %v516, 2
      %v518 = vadd.f32 %v516, %v517
      %v519 = vrot.slane %v518, 1
      %v520 = vadd.f32 %v518, %v519
      %v521 = vrot.slane %v498, 4
      %v522 = vadd.f32 %v498, %v521
      %v523 = vrot.slane %v522, 2
      %v524 = vadd.f32 %v522, %v523
      %v525 = vrot.slane %v524, 1
      %v526 = vadd.f32 %v524, %v525
      %v527 = vrot.slane %v499, 4
      %v528 = vadd.f32 %v499, %v527
      %v529 = vrot.slane %v528, 2
      %v530 = vadd.f32 %v528, %v529
      %v531 = vrot.slane %v530, 1
      %v532 = vadd.f32 %v530, %v531
      %v533 = vrot.slane %v500, 4
      %v534 = vadd.f32 %v500, %v533
      %v535 = vrot.slane %v534, 2
      %v536 = vadd.f32 %v534, %v535
      %v537 = vrot.slane %v536, 1
      %v538 = vadd.f32 %v536, %v537
      %v539 = vrot.slane %v501, 4
      %v540 = vadd.f32 %v501, %v539
      %v541 = vrot.slane %v540, 2
      %v542 = vadd.f32 %v540, %v541
      %v543 = vrot.slane %v542, 1
      %v544 = vadd.f32 %v542, %v543
      %v545 = vrot.slane %v502, 4
      %v546 = vadd.f32 %v502, %v545
      %v547 = vrot.slane %v546, 2
      %v548 = vadd.f32 %v546, %v547
      %v549 = vrot.slane %v548, 1
      %v550 = vadd.f32 %v548, %v549
      %v551 = vld [vmem:[#allocation4] sm:$0xff]
      %v552 = vld [vmem:[#allocation4 + $0x8] sm:$0xff]
      %v553 = vld [vmem:[#allocation4 + $0x10] sm:$0xff]
      %v554 = vld [vmem:[#allocation4 + $0x18] sm:$0xff]
      %v555 = vld [vmem:[#allocation4 + $0x20] sm:$0xff]
      %v556 = vld [vmem:[#allocation4 + $0x28] sm:$0xff]
      %v557 = vld [vmem:[#allocation4 + $0x30] sm:$0xff]
      %v558 = vld [vmem:[#allocation4 + $0x38] sm:$0xff]
      %v559 = vld [vmem:[#allocation4 + $0x40] sm:$0xff]
      %v560 = vld [vmem:[#allocation4 + $0x48] sm:$0xff]
      %v561 = vld [vmem:[#allocation4 + $0x50] sm:$0xff]
      %v562 = vld [vmem:[#allocation4 + $0x58] sm:$0xff]
      %v563 = vld [vmem:[#allocation4 + $0x60] sm:$0xff]
      %v564 = vld [vmem:[#allocation4 + $0x68] sm:$0xff]
      %v565 = vld [vmem:[#allocation4 + $0x70] sm:$0xff]
      %v566 = vld [vmem:[#allocation4 + $0x78] sm:$0xff]
      %v567 = vld [vmem:[#allocation6] sm:$0xff]
      %v568 = vld [vmem:[#allocation6 + $0x8] sm:$0xff]
      %v569 = vld [vmem:[#allocation6 + $0x10] sm:$0xff]
      %v570 = vld [vmem:[#allocation6 + $0x18] sm:$0xff]
      %v571 = vld [vmem:[#allocation6 + $0x20] sm:$0xff]
      %v572 = vld [vmem:[#allocation6 + $0x28] sm:$0xff]
      %v573 = vld [vmem:[#allocation6 + $0x30] sm:$0xff]
      %v574 = vld [vmem:[#allocation6 + $0x38] sm:$0xff]
      %v575 = vld [vmem:[#allocation6 + $0x40] sm:$0xff]
      %v576 = vld [vmem:[#allocation6 + $0x48] sm:$0xff]
      %v577 = vld [vmem:[#allocation6 + $0x50] sm:$0xff]
      %v578 = vld [vmem:[#allocation6 + $0x58] sm:$0xff]
      %v579 = vld [vmem:[#allocation6 + $0x60] sm:$0xff]
      %v580 = vld [vmem:[#allocation6 + $0x68] sm:$0xff]
      %v581 = vld [vmem:[#allocation6 + $0x70] sm:$0xff]
      %v582 = vld [vmem:[#allocation6 + $0x78] sm:$0xff]
      %583 = vmatpush.msra.mxu0 %v582
      %584 = vmatpush.msra.mxu0 %v581
      %585 = vmatpush.msra.mxu0 %v580
      %586 = vmatpush.msra.mxu0 %v579
      %587 = vmatpush.msra.mxu0 %v578
      %588 = vmatpush.msra.mxu0 %v577
      %589 = vmatpush.msra.mxu0 %v576
      %590 = vmatpush.msra.mxu0 %v575
      %591 = vmatpush.msra.mxu0 %v574
      %592 = vmatpush.msra.mxu0 %v573
      %593 = vmatpush.msra.mxu0 %v572
      %594 = vmatpush.msra.mxu0 %v571
      %595 = vmatpush.msra.mxu0 %v570
      %596 = vmatpush.msra.mxu0 %v569
      %597 = vmatpush.msra.mxu0 %v568
      %598 = vmatpush.msra.mxu0 %v567
      %599 = vmatmul.f32.gmra.mxu0 %v126
      %v600 = vpop.f32.mrf.mxu0
      %v601 = vadd.f32 0.0, %v600
      %602 = vdwg.mxu0
      %v611 = vsel %vm318, %v514, %v508
      %v612 = vsel %vm320, %v520, %v611
      %v613 = vsel %vm322, %v526, %v612
      %v614 = vsel %vm324, %v532, %v613
      %v615 = vsel %vm326, %v538, %v614
      %v616 = vsel %vm328, %v544, %v615
      %v617 = vsel %vm330, %v550, %v616
      %619 = vmatpush.msra.mxu0 %v566
      %620 = vmatpush.msra.mxu0 %v565
      %621 = vmatpush.msra.mxu0 %v564
      %622 = vmatpush.msra.mxu0 %v563
      %623 = vmatpush.msra.mxu0 %v562
      %624 = vmatpush.msra.mxu0 %v561
      %625 = vmatpush.msra.mxu0 %v560
      %626 = vmatpush.msra.mxu0 %v559
      %627 = vmatpush.msra.mxu0 %v558
      %628 = vmatpush.msra.mxu0 %v557
      %629 = vmatpush.msra.mxu0 %v556
      %630 = vmatpush.msra.mxu0 %v555
      %631 = vmatpush.msra.mxu0 %v554
      %632 = vmatpush.msra.mxu0 %v553
      %633 = vmatpush.msra.mxu0 %v552
      %634 = vmatpush.msra.mxu0 %v551
      %635 = vmatmul.f32.gmra.mxu0 %v617
      %v636 = vpop.f32.mrf.mxu0
      %v637 = vadd.f32 %v601, %v636
      %638 = vdwg.mxu0
      %v639 = vld [vmem:[%s6] sm:$0x1]
      %v641 = vperm.slane %v639, 0
      %v643 = vadd.f32 %v637, %v641
      %v644 = vld [vmem:[#allocation8] sm:$0xff]
      %v645 = vld [vmem:[#allocation8 + $0x8] sm:$0xff]
      %v646 = vld [vmem:[#allocation8 + $0x10] sm:$0xff]
      %v647 = vld [vmem:[#allocation8 + $0x18] sm:$0xff]
      %v648 = vld [vmem:[#allocation8 + $0x20] sm:$0xff]
      %v649 = vld [vmem:[#allocation8 + $0x28] sm:$0xff]
      %v650 = vld [vmem:[#allocation8 + $0x30] sm:$0xff]
      %v651 = vld [vmem:[#allocation8 + $0x38] sm:$0xff]
      %v652 = vld [vmem:[#allocation8 + $0x40] sm:$0xff]
      %v653 = vld [vmem:[#allocation8 + $0x48] sm:$0xff]
      %v654 = vld [vmem:[#allocation8 + $0x50] sm:$0xff]
      %v655 = vld [vmem:[#allocation8 + $0x58] sm:$0xff]
      %v656 = vld [vmem:[#allocation8 + $0x60] sm:$0xff]
      %v657 = vld [vmem:[#allocation8 + $0x68] sm:$0xff]
      %v658 = vld [vmem:[#allocation8 + $0x70] sm:$0xff]
      %v659 = vld [vmem:[#allocation8 + $0x78] sm:$0xff]
      %v660 = vld [vmem:[#allocation9] sm:$0xff]
      %v661 = vld [vmem:[#allocation9 + $0x8] sm:$0xff]
      %v662 = vld [vmem:[#allocation9 + $0x10] sm:$0xff]
      %v663 = vld [vmem:[#allocation9 + $0x18] sm:$0xff]
      %v664 = vld [vmem:[#allocation9 + $0x20] sm:$0xff]
      %v665 = vld [vmem:[#allocation9 + $0x28] sm:$0xff]
      %v666 = vld [vmem:[#allocation9 + $0x30] sm:$0xff]
      %v667 = vld [vmem:[#allocation9 + $0x38] sm:$0xff]
      %v668 = vld [vmem:[#allocation9 + $0x40] sm:$0xff]
      %v669 = vld [vmem:[#allocation9 + $0x48] sm:$0xff]
      %v670 = vld [vmem:[#allocation9 + $0x50] sm:$0xff]
      %v671 = vld [vmem:[#allocation9 + $0x58] sm:$0xff]
      %v672 = vld [vmem:[#allocation9 + $0x60] sm:$0xff]
      %v673 = vld [vmem:[#allocation9 + $0x68] sm:$0xff]
      %v674 = vld [vmem:[#allocation9 + $0x70] sm:$0xff]
      %v675 = vld [vmem:[#allocation9 + $0x78] sm:$0xff]
      %676 = vmatpush.msra.mxu0 %v675
      %677 = vmatpush.msra.mxu0 %v674
      %678 = vmatpush.msra.mxu0 %v673
      %679 = vmatpush.msra.mxu0 %v672
      %680 = vmatpush.msra.mxu0 %v671
      %681 = vmatpush.msra.mxu0 %v670
      %682 = vmatpush.msra.mxu0 %v669
      %683 = vmatpush.msra.mxu0 %v668
      %684 = vmatpush.msra.mxu0 %v667
      %685 = vmatpush.msra.mxu0 %v666
      %686 = vmatpush.msra.mxu0 %v665
      %687 = vmatpush.msra.mxu0 %v664
      %688 = vmatpush.msra.mxu0 %v663
      %689 = vmatpush.msra.mxu0 %v662
      %690 = vmatpush.msra.mxu0 %v661
      %691 = vmatpush.msra.mxu0 %v660
      %692 = vmatmul.f32.gmra.mxu0 %v127
      %v693 = vpop.f32.mrf.mxu0
      %v694 = vadd.f32 0.0, %v693
      %695 = vdwg.mxu0
      %696 = vmatpush.msra.mxu0 %v659
      %697 = vmatpush.msra.mxu0 %v658
      %698 = vmatpush.msra.mxu0 %v657
      %699 = vmatpush.msra.mxu0 %v656
      %700 = vmatpush.msra.mxu0 %v655
      %701 = vmatpush.msra.mxu0 %v654
      %702 = vmatpush.msra.mxu0 %v653
      %703 = vmatpush.msra.mxu0 %v652
      %704 = vmatpush.msra.mxu0 %v651
      %705 = vmatpush.msra.mxu0 %v650
      %706 = vmatpush.msra.mxu0 %v649
      %707 = vmatpush.msra.mxu0 %v648
      %708 = vmatpush.msra.mxu0 %v647
      %709 = vmatpush.msra.mxu0 %v646
      %710 = vmatpush.msra.mxu0 %v645
      %711 = vmatpush.msra.mxu0 %v644
      %712 = vmatmul.f32.gmra.mxu0 %v643
      %v713 = vpop.f32.mrf.mxu0
      %v714 = vadd.f32 %v694, %v713
      %715 = vdwg.mxu0
      %v716 = vld [vmem:[%s9] sm:$0x1]
      %v718 = vperm.slane %v716, 0
      %v720 = vadd.f32 %v714, %v718
      %v721 = vtanh.pop %v720
      %s722 = smul.u32 0, 8
      %v723 = vlaneseq
      %v724 = vshrl.u32 %v723, 7
      %v725 = vstv %s722
      %v726 = vadd.s32 %v725, %v724
      %vm727 = vcmp.lt.s32.totalorder %v726, 2
      %v728 = vsel %vm727, %v721, 0.0
      %729 = vst [vmem:[%s14] sm:$0xff] %v728
      %vm730 = vcmask 7168
      %731 = vst.msk [vmem:[#allocation2] sm:$0xff] %vm730, -inf
      %732 = vst.msk [vmem:[#allocation3] sm:$0xff] %vm730, 0.0
    $region73: #{_decoder_step_impl.2} parent=1 // pred_fallthru
      _
    %v733 = vld [vmem:[%s14] sm:$0xff]
    %v734 = vld [vmem:[#allocation11] sm:$0xff]
    %v735 = vld [vmem:[#allocation11 + $0x8] sm:$0xff]
    %v736 = vld [vmem:[#allocation11 + $0x10] sm:$0xff]
    %v737 = vld [vmem:[#allocation11 + $0x18] sm:$0xff]
    %v738 = vld [vmem:[#allocation11 + $0x20] sm:$0xff]
    %v739 = vld [vmem:[#allocation11 + $0x28] sm:$0xff]
    %v740 = vld [vmem:[#allocation11 + $0x30] sm:$0xff]
    %v741 = vld [vmem:[#allocation11 + $0x38] sm:$0xff]
    %v742 = vld [vmem:[#allocation11 + $0x40] sm:$0xff]
    %v743 = vld [vmem:[#allocation11 + $0x48] sm:$0xff]
    %v744 = vld [vmem:[#allocation11 + $0x50] sm:$0xff]
    %v745 = vld [vmem:[#allocation11 + $0x58] sm:$0xff]
    %v746 = vld [vmem:[#allocation11 + $0x60] sm:$0xff]
    %v747 = vld [vmem:[#allocation11 + $0x68] sm:$0xff]
    %v748 = vld [vmem:[#allocation11 + $0x70] sm:$0xff]
    %v749 = vld [vmem:[#allocation11 + $0x78] sm:$0xff]
    %v750 = vld [vmem:[%s11] sm:$0x1]
    %v752 = vperm.slane %v750, 0
    %754 = vmatpush.msra.mxu0 %v749
    %755 = vmatpush.msra.mxu0 %v748
    %756 = vmatpush.msra.mxu0 %v747
    %757 = vmatpush.msra.mxu0 %v746
    %758 = vmatpush.msra.mxu0 %v745
    %759 = vmatpush.msra.mxu0 %v744
    %760 = vmatpush.msra.mxu0 %v743
    %761 = vmatpush.msra.mxu0 %v742
    %762 = vmatpush.msra.mxu0 %v741
    %763 = vmatpush.msra.mxu0 %v740
    %764 = vmatpush.msra.mxu0 %v739
    %765 = vmatpush.msra.mxu0 %v738
    %766 = vmatpush.msra.mxu0 %v737
    %767 = vmatpush.msra.mxu0 %v736
    %768 = vmatpush.msra.mxu0 %v735
    %769 = vmatpush.msra.mxu0 %v734
    %770 = vmatmul.f32.gmra.mxu0 %v733
    %v771 = vpop.f32.mrf.mxu0
    %v772 = vadd.f32 %v752, %v771
    %773 = vdwg.mxu0
    %s774 = smul.u32 0, 128
    %v775 = vlaneseq
    %v776 = vand.u32 %v775, 127
    %v777 = vstv %s774
    %v778 = vadd.s32 %v777, %v776
    %vm779 = vcmp.lt.s32.totalorder %v778, 48
    %v780 = vsel %vm779, %v772, -1e+30
    %781 = vst [vmem:[%s12] sm:$0xff] %v780
    %v782 = vld [vmem:[#allocation2] sm:$0xff]
    %783 = vmax.xlane.f32.xlu0 %v780
    %v784 = vpop.xlane.xlu0 %783
    %v785 = vmax.f32 %v782, %v784
    %v786 = vld [vmem:[#allocation3] sm:$0xff]
    %v787 = vsub.f32 %v782, %v785
    %v788 = vmul.f32 %v787, 1.442695
    %v789 = vpow.pop %v788
    %v790 = vmul.f32 %v786, %v789
    %792 = vset.pattern.permute.xlu0 0
    %793 = vperm.xlu0 %792, %v785
    %v794 = vpop.permute.xlu0 %793
    %v796 = vsub.f32 %v780, %v794
    %v797 = vmul.f32 %v796, 1.442695
    %v798 = vpow.pop %v797
    %799 = vadd.xlane.f32.xlu0 %v798
    %v800 = vpop.xlane.xlu0 %799
    %v801 = vadd.f32 %v790, %v800
    %vm802 = vcmask 7168
    %803 = vst.msk [vmem:[#allocation3] sm:$0xff] %vm802, %v801
    %804 = vst.msk [vmem:[#allocation2] sm:$0xff] %vm802, %v785
    // Predicated region
    $region74: #{_decoder_step_impl.2} parent=1 // pred_check
      %p805 = pneg %p122
    $region75: #{_decoder_step_impl.2} parent=1 // pred_check_branch
      %807 = sbr.rel (%p805) target = $region77
    $region76: #{_decoder_step_impl.2} parent=1 // pred_region
      %v808 = vld [vmem:[#allocation2] sm:$0xff]
      %v809 = vld [vmem:[#allocation3] sm:$0xff]
      %v810 = vlog2.pop %v809
      %v811 = vmul.f32 %v810, 0.6931472
      %v812 = vadd.f32 %v808, %v811
      %813 = vst.msk [vmem:[%s13] sm:$0xff] %vm802, %v812
    $region77: #{_decoder_step_impl.2} parent=1 // pred_fallthru
      _
    // Predicated region
    $region78: #{_decoder_step_impl.2} parent=1 // pred_check
      _
    $region79: #{_decoder_step_impl.2} parent=1 // pred_check_branch
      %815 = sbr.rel (0) target = $region81
    $region80: #{_decoder_step_impl.2} parent=1 // pred_region
      _
    $region81: #{_decoder_step_impl.2} parent=1 // pred_fallthru
      _
    // Predicated region
    $region82: #{_decoder_step_impl.2} parent=1 // pred_check
      _
    $region83: #{_decoder_step_impl.2} parent=1 // pred_check_branch
      %817 = sbr.rel (0) target = $region85
    $region84: #{_decoder_step_impl.2} parent=1 // pred_region
      _
    $region85: #{_decoder_step_impl.2} parent=1 // pred_fallthru
      _
    // Predicated region
    $region86: #{_decoder_step_impl.2} parent=1 // pred_check
      _
    $region87: #{_decoder_step_impl.2} parent=1 // pred_check_branch
      %819 = sbr.rel (0) target = $region89
    $region88: #{_decoder_step_impl.2} parent=1 // pred_region
      _
    $region89: #{_decoder_step_impl.2} parent=1 // pred_fallthru
      _
    // Predicated region
    $region90: #{_decoder_step_impl.2} parent=1 // pred_check
      _
    $region91: #{_decoder_step_impl.2} parent=1 // pred_check_branch
      %821 = sbr.rel (0) target = $region93
    $region92: #{_decoder_step_impl.2} parent=1 // pred_region
      _
    $region93: #{_decoder_step_impl.2} parent=1 // pred_fallthru
      _
    // Predicated region
    $region94: #{_decoder_step_impl.2} parent=1 // pred_check
      _
    $region95: #{_decoder_step_impl.2} parent=1 // pred_check_branch
      %823 = sbr.rel (0) target = $region97
    $region96: #{_decoder_step_impl.2} parent=1 // pred_region
      _
    $region97: #{_decoder_step_impl.2} parent=1 // pred_fallthru
      _
    // Predicated region
    $region98: #{_decoder_step_impl.2} parent=1 // pred_check
      _
    $region99: #{_decoder_step_impl.2} parent=1 // pred_check_branch
      %825 = sbr.rel (0) target = $region101
    $region100: #{_decoder_step_impl.2} parent=1 // pred_region
      _
    $region101: #{_decoder_step_impl.2} parent=1 // pred_fallthru
      _
    %826 = vsyncpa [#allocation5], 1
    %827 = vsyncpa [#allocation7], 1
    %828 = vsyncpa [#allocation10], 1

</llo_original>
